<compile_context>
chip_gen: v5e
topology: v5e:2x2
jax: 0.10.0
libtpu: 0.0.40
codegen_flags: <defaults>
</compile_context>

<pallas_src>
import numpy as np
import jax
import jax.numpy as jnp
from jax.experimental import pallas as pl
from jax.experimental.pallas import tpu as pltpu


# ----------------------------- parameter construction (host glue) -----------------------------

def make_1d_gaussian(size, fwhm=3, center=None):
    x = np.arange(0, size, 1, dtype=np.float64)
    if center is None:
        center = size // 2
    return np.exp(-4.0 * np.log(2.0) * (x - center) ** 2 / fwhm ** 2)


def _reflect_index(idx, length):
    # torch F.pad(mode='reflect') index mapping (boundary excluded)
    if length == 1:
        return 0
    period = 2 * (length - 1)
    idx = abs(idx) % period
    if idx >= length:
        idx = period - idx
    return idx


def reflect_pad_matrix(length, pad):
    # padded = x @ R,  R: (length, length + 2*pad)
    total = length + 2 * pad
    R = np.zeros((length, total), dtype=np.float64)
    for i in range(total):
        R[_reflect_index(i - pad, length), i] = 1.0
    return R


def valid_corr_matrix(in_len, filt):
    # valid cross-correlation (== F.conv1d) as matmul:  out = padded @ C
    k = filt.shape[0]
    out_len = in_len - k + 1
    C = np.zeros((in_len, out_len), dtype=np.float64)
    for o in range(out_len):
        C[o:o + k, o] = filt
    return C


def bilinear_matrix(out_size, in_size):
    # align_corners=True 1-D bilinear interpolation matrix, shape (out_size, in_size)
    W = np.zeros((out_size, in_size), dtype=np.float64)
    if out_size == 1:
        W[0, 0] = 1.0
        return W
    scale = (in_size - 1) / (out_size - 1)
    for d in range(out_size):
        src = d * scale
        i0 = min(int(np.floor(src)), in_size - 1)
        i1 = min(i0 + 1, in_size - 1)
        f = src - i0
        W[d, i0] += 1.0 - f
        W[d, i1] += f
    return W


# ------------------------------- saliency "homo" (glue) ----------------------------------

def synthetic_homo_forward(imgs, v_pts):
    # TODO(synk): the real homo_layer is an injected external module; this is a
    # deterministic synthetic two-plane-style saliency (gaussian bump around the
    # vanishing point, modulated by image content), always strictly positive.
    N, C, H, W = imgs.shape
    ys = jnp.arange(H, dtype=jnp.float32)[:, None]
    xs = jnp.arange(W, dtype=jnp.float32)[None, :]
    vx = v_pts[0, 0]
    vy = v_pts[0, 1]
    d2 = (xs - vx) ** 2 + (ys - vy) ** 2
    bump = jnp.exp(-d2 / (2.0 * (0.25 * (H + W)) ** 2)) + 0.1          # (H, W)
    img_mean = jnp.mean(jnp.abs(imgs), axis=1, keepdims=True)          # (N, 1, H, W)
    return bump[None, None] * (1.0 + 0.1 * img_mean)                   # (N, 1, H, W)


def nearest_resize(x, out_hw):
    # F.interpolate(x, size, mode='nearest')  for NCHW
    N, C, H, W = x.shape
    Ho, Wo = out_hw
    hi = jnp.floor(jnp.arange(Ho, dtype=jnp.float32) * (H / Ho)).astype(jnp.int32)
    wi = jnp.floor(jnp.arange(Wo, dtype=jnp.float32) * (W / Wo)).astype(jnp.int32)
    return x[:, :, hi[:, None], wi[None, :]]


# ------------------------------------ Pallas kernel ---------------------------------------

def _kde_grid_kernel(sal_ref, abx_ref, aby_ref, wxT_ref, wyT_ref, xo_ref, yo_ref):
    # sal_ref : (N, Gh, Gw) resized saliency
    # abx_ref : (Gw, 2*Gw)  [reflect-pad+gauss-conv weights | 2 * P_x-weighted pad+conv]
    # aby_ref : (Gh, 2*Gh)  same for the y axis
    # wxT/wyT : (Gw, W_out), (Gh, H_out) align_corners bilinear interp (transposed)
    # xo_ref  : (N, W_out) x-grid vector (constant along H in the full grid)
    # yo_ref  : (N, H_out) y-grid vector (constant along W in the full grid)
    gw = abx_ref.shape[0]
    gh = aby_ref.shape[0]

    sal = sal_ref[...]
    x_sal = jnp.sum(sal, axis=1)          # saliency.sum(dim=2) -> (N, Gw)  (sublane reduce, XLU)
    y_sal = jnp.sum(sal, axis=2)          # saliency.sum(dim=3) -> (N, Gh)  (lane reduce, XLU)

    eps = jnp.float32(1e-12)

    # One fused MXU issue per axis: cols [0:G) = conv weights, [G:2G) = 2*weighted offsets.
    x_wb = jnp.dot(x_sal, abx_ref[...], preferred_element_type=jnp.float32)   # (N, 2*Gw)
    xg = jnp.clip(x_wb[:, gw:] / jnp.maximum(x_wb[:, :gw], eps) - 1.0, -1.0, 1.0)   # (N, Gw)

    y_wb = jnp.dot(y_sal, aby_ref[...], preferred_element_type=jnp.float32)   # (N, 2*Gh)
    yg = jnp.clip(y_wb[:, gh:] / jnp.maximum(y_wb[:, :gh], eps) - 1.0, -1.0, 1.0)   # (N, Gh)

    # align_corners=True bilinear resize of a separable grid == 1-D interpolation,
    # written straight into the lane-dense output vectors.
    xo_ref[...] = jnp.dot(xg, wxT_ref[...], preferred_element_type=jnp.float32)  # (N, W_out)
    yo_ref[...] = jnp.dot(yg, wyT_ref[...], preferred_element_type=jnp.float32)  # (N, H_out)


# ---------------------------------------- module -------------------------------------------

class BaseKDEGridPallas:
    def __init__(self, warp_scale=1.0, grid_shape=(31, 51), separable=True,
                 attraction_fwhm=13, anti_crop=True):
        assert separable, "only the separable path of BaseKDEGrid is implemented"
        self.warp_scale = warp_scale
        self.grid_shape = grid_shape
        self.padding_size = min(grid_shape) - 1
        self.total_shape = tuple(d + 2 * self.padding_size for d in grid_shape)
        p = self.padding_size
        gh, gw = grid_shape
        th, tw = self.total_shape

        filt = make_1d_gaussian(2 * p + 1, fwhm=attraction_fwhm)
        px = (np.arange(tw, dtype=np.float64) - p) / (gw - 1.0)   # P_basis_x
        py = (np.arange(th, dtype=np.float64) - p) / (gh - 1.0)   # P_basis_y

        # anti_crop=True -> reflect padding; fold pad + conv + P-basis (+ the "*2"
        # of the grid normalization) into per-axis matmul matrices.
        assert anti_crop, "only anti_crop=True (reflect padding) is implemented"
        Rx = reflect_pad_matrix(gw, p)           # (gw, tw)
        Ry = reflect_pad_matrix(gh, p)           # (gh, th)
        Cx = valid_corr_matrix(tw, filt)         # (tw, gw)
        Cy = valid_corr_matrix(th, filt)         # (th, gh)

        Ax = Rx @ Cx                             # conv weights (x)
        Bx = 2.0 * ((Rx * px[None, :]) @ Cx)     # 2 * weighted offsets (x)
        Ay = Ry @ Cy                             # conv weights (y)
        By = 2.0 * ((Ry * py[None, :]) @ Cy)     # 2 * weighted offsets (y)

        # Fuse the weight / weighted-offset projections into one matrix per axis.
        self.ABx = jnp.asarray(np.concatenate([Ax, Bx], axis=1), jnp.float32)  # (gw, 2*gw)
        self.ABy = jnp.asarray(np.concatenate([Ay, By], axis=1), jnp.float32)  # (gh, 2*gh)

        self.filt = filt
        self.px = px
        self.py = py
        self._interp_cache = {}

    # ----- host-side constant cache -----
    def _interp_mats(self, out_h, out_w):
        key = (out_h, out_w)
        if key not in self._interp_cache:
            gh, gw = self.grid_shape
            WxT = jnp.asarray(bilinear_matrix(out_w, gw).T, jnp.float32)  # (gw, out_w)
            WyT = jnp.asarray(bilinear_matrix(out_h, gh).T, jnp.float32)  # (gh, out_h)
            self._interp_cache[key] = (WxT, WyT)
        return self._interp_cache[key]

    def get_saliency(self, imgs, v_pts):
        sal = synthetic_homo_forward(imgs, v_pts[None, :])            # homo.forward(imgs, v_pts[None])
        sal = nearest_resize(sal, self.grid_shape)                    # F.interpolate(., (31, 51))
        return sal                                                    # (N, 1, 31, 51)

    def forward_vectors(self, imgs, v_pts):
        """Return the separable grid as two lane-dense vectors xo:(N, W_out), yo:(N, H_out).

        Preferred entry point for downstream Pallas consumers (e.g. a warp /
        grid_sample kernel) that can reconstruct grid[n, h, w] = (xo[n, w], yo[n, h])
        on the fly without materializing the (N, H_out, W_out, 2) tensor.
        """
        assert imgs.ndim == 4, "Expected imgs in BCHW format"
        N, C, H, W = imgs.shape
        out_h = int(H * self.warp_scale)
        out_w = int(W * self.warp_scale)

        sal = self.get_saliency(imgs, v_pts)                          # (N, 1, gh, gw)
        WxT, WyT = self._interp_mats(out_h, out_w)

        vmem = pl.BlockSpec(memory_space=pltpu.MemorySpace.VMEM)
        xo, yo = pl.pallas_call(
            _kde_grid_kernel,
            out_shape=(jax.ShapeDtypeStruct((N, out_w), jnp.float32),
                       jax.ShapeDtypeStruct((N, out_h), jnp.float32)),
            in_specs=[vmem] * 5,
            out_specs=(vmem, vmem),
            compiler_params=pltpu.CompilerParams(
                vmem_limit_bytes=16 * 1024 * 1024),
        )(sal[:, 0, :, :], self.ABx, self.ABy, WxT, WyT)
        return xo, yo

    def forward(self, imgs, v_pts):
        assert imgs.ndim == 4, "Expected imgs in BCHW format"
        N, C, H, W = imgs.shape
        out_h = int(H * self.warp_scale)
        out_w = int(W * self.warp_scale)

        xo, yo = self.forward_vectors(imgs, v_pts)

        # Module contract: (N, H_out, W_out, 2) == torch grid.permute(0, 2, 3, 1).
        # The broadcast is pure layout writeback and is done outside the Pallas
        # kernel (XLA); bandwidth-sensitive callers should use forward_vectors().
        # TODO(synk): could emit this materialized grid in bf16 to halve HBM bytes.
        xgrid = jnp.broadcast_to(xo[:, None, :], (N, out_h, out_w))
        ygrid = jnp.broadcast_to(yo[:, :, None], (N, out_h, out_w))
        return jnp.stack([xgrid, ygrid], axis=-1)                     # (N, out_h, out_w, 2)


# -------------------------------- numpy reference (torch-style) ----------------------------

def reference_forward(sal, filt, px, py, pad, grid_shape, out_shape):
    sal = np.asarray(sal, dtype=np.float64)[:, 0]    # (N, gh, gw)
    N = sal.shape[0]
    gh, gw = grid_shape
    Ho, Wo = out_shape
    x_sal = sal.sum(axis=1)                          # (N, gw)
    y_sal = sal.sum(axis=2)                          # (N, gh)

    def one_axis(s, Pb, out_len):
        padded = np.pad(s, ((0, 0), (pad, pad)), mode='reflect')
        K = filt.shape[0]
        w = np.zeros((N, out_len))
        wo = np.zeros((N, out_len))
        weighted = padded * Pb[None, :]
        for o in range(out_len):
            w[:, o] = (padded[:, o:o + K] * filt).sum(-1)
            wo[:, o] = (weighted[:, o:o + K] * filt).sum(-1)
        return np.clip(wo / w * 2.0 - 1.0, -1.0, 1.0)

    xg = one_axis(x_sal, px, gw)                     # (N, gw)
    yg = one_axis(y_sal, py, gh)                     # (N, gh)
    xo = xg @ bilinear_matrix(Wo, gw).T              # (N, Wo)
    yo = yg @ bilinear_matrix(Ho, gh).T              # (N, Ho)
    out = np.zeros((N, Ho, Wo, 2))
    out[..., 0] = xo[:, None, :]
    out[..., 1] = yo[:, :, None]
    return out


if __name__ == "__main__":
    key = jax.random.PRNGKey(0)
    imgs = jax.random.normal(key, (2, 4, 16, 16), dtype=jnp.float32)   # BCHW
    v_pts = jnp.array([8.0, 5.0], dtype=jnp.float32)                   # vanishing point (x, y)

    model = BaseKDEGridPallas(warp_scale=1.0)
    grid = model.forward(imgs, v_pts)
    grid = jax.block_until_ready(grid)
    assert grid.shape == (2, 16, 16, 2), grid.shape

    sal = jax.block_until_ready(model.get_saliency(imgs, v_pts))
    ref = reference_forward(sal, model.filt, model.px, model.py,
                            model.padding_size, model.grid_shape, (16, 16))
    np.testing.assert_allclose(np.asarray(grid), ref, atol=2e-3, rtol=2e-3)
    print("KERNEL_OK")
</pallas_src>

<mosaic_0001>
module attributes {stable_mosaic.version = 11 : i64} {
  func.func @_kde_grid_kernel(%arg0: memref<2x31x51xf32, #tpu.memory_space<vmem>>, %arg1: memref<51x102xf32, #tpu.memory_space<vmem>>, %arg2: memref<31x62xf32, #tpu.memory_space<vmem>>, %arg3: memref<51x16xf32, #tpu.memory_space<vmem>>, %arg4: memref<31x16xf32, #tpu.memory_space<vmem>>, %arg5: memref<2x16xf32, #tpu.memory_space<vmem>>, %arg6: memref<2x16xf32, #tpu.memory_space<vmem>>) attributes {dimension_semantics = [], scalar_prefetch = 0 : i64, scratch_operands = 0 : i64, tpu.core_type = #tpu.core_type<tc>} {
    %c0 = arith.constant 0 : index
    %c0_0 = arith.constant 0 : index
    %c0_1 = arith.constant 0 : index
    %0 = vector.load %arg0[%c0, %c0_0, %c0_1] : memref<2x31x51xf32, #tpu.memory_space<vmem>>, vector<2x31x51xf32>
    %cst = arith.constant dense<0.000000e+00> : vector<2x51xf32>
    %1 = vector.multi_reduction <add>, %0, %cst [1] : vector<2x31x51xf32> to vector<2x51xf32>
    %cst_2 = arith.constant dense<0.000000e+00> : vector<2x31xf32>
    %2 = vector.multi_reduction <add>, %0, %cst_2 [2] : vector<2x31x51xf32> to vector<2x31xf32>
    %c0_3 = arith.constant 0 : index
    %c0_4 = arith.constant 0 : index
    %3 = vector.load %arg1[%c0_3, %c0_4] : memref<51x102xf32, #tpu.memory_space<vmem>>, vector<51x102xf32>
    %cst_5 = arith.constant dense<0.000000e+00> : vector<2x102xf32>
    %4 = tpu.matmul %1, %3, %cst_5 {dimension_numbers = #tpu.dot_dimension_numbers<[1], [0], [0], [1], [0, 0, 1, 1], [], []>} : vector<2x51xf32>, vector<51x102xf32>, vector<2x102xf32> -> vector<2x102xf32>
    %5 = vector.extract_strided_slice %4 {offsets = [0, 51], sizes = [2, 51], strides = [1, 1]} : vector<2x102xf32> to vector<2x51xf32>
    %6 = vector.extract_strided_slice %4 {offsets = [0, 0], sizes = [2, 51], strides = [1, 1]} : vector<2x102xf32> to vector<2x51xf32>
    %cst_6 = arith.constant 9.99999996E-13 : f32
    %7 = vector.broadcast %cst_6 : f32 to vector<2x51xf32>
    %8 = arith.maximumf %6, %7 : vector<2x51xf32>
    %9 = arith.divf %5, %8 : vector<2x51xf32>
    %cst_7 = arith.constant 1.000000e+00 : f32
    %10 = vector.broadcast %cst_7 : f32 to vector<2x51xf32>
    %11 = arith.subf %9, %10 : vector<2x51xf32>
    %cst_8 = arith.constant -1.000000e+00 : f32
    %cst_9 = arith.constant 1.000000e+00 : f32
    %12 = vector.broadcast %cst_8 : f32 to vector<2x51xf32>
    %13 = arith.maximumf %12, %11 : vector<2x51xf32>
    %14 = vector.broadcast %cst_9 : f32 to vector<2x51xf32>
    %15 = arith.minimumf %14, %13 : vector<2x51xf32>
    %c0_10 = arith.constant 0 : index
    %c0_11 = arith.constant 0 : index
    %16 = vector.load %arg2[%c0_10, %c0_11] : memref<31x62xf32, #tpu.memory_space<vmem>>, vector<31x62xf32>
    %cst_12 = arith.constant dense<0.000000e+00> : vector<2x62xf32>
    %17 = tpu.matmul %2, %16, %cst_12 {dimension_numbers = #tpu.dot_dimension_numbers<[1], [0], [0], [1], [0, 0, 1, 1], [], []>} : vector<2x31xf32>, vector<31x62xf32>, vector<2x62xf32> -> vector<2x62xf32>
    %18 = vector.extract_strided_slice %17 {offsets = [0, 31], sizes = [2, 31], strides = [1, 1]} : vector<2x62xf32> to vector<2x31xf32>
    %19 = vector.extract_strided_slice %17 {offsets = [0, 0], sizes = [2, 31], strides = [1, 1]} : vector<2x62xf32> to vector<2x31xf32>
    %cst_13 = arith.constant 9.99999996E-13 : f32
    %20 = vector.broadcast %cst_13 : f32 to vector<2x31xf32>
    %21 = arith.maximumf %19, %20 : vector<2x31xf32>
    %22 = arith.divf %18, %21 : vector<2x31xf32>
    %cst_14 = arith.constant 1.000000e+00 : f32
    %23 = vector.broadcast %cst_14 : f32 to vector<2x31xf32>
    %24 = arith.subf %22, %23 : vector<2x31xf32>
    %cst_15 = arith.constant -1.000000e+00 : f32
    %cst_16 = arith.constant 1.000000e+00 : f32
    %25 = vector.broadcast %cst_15 : f32 to vector<2x31xf32>
    %26 = arith.maximumf %25, %24 : vector<2x31xf32>
    %27 = vector.broadcast %cst_16 : f32 to vector<2x31xf32>
    %28 = arith.minimumf %27, %26 : vector<2x31xf32>
    %c0_17 = arith.constant 0 : index
    %c0_18 = arith.constant 0 : index
    %29 = vector.load %arg3[%c0_17, %c0_18] : memref<51x16xf32, #tpu.memory_space<vmem>>, vector<51x16xf32>
    %cst_19 = arith.constant dense<0.000000e+00> : vector<2x16xf32>
    %30 = tpu.matmul %15, %29, %cst_19 {dimension_numbers = #tpu.dot_dimension_numbers<[1], [0], [0], [1], [0, 0, 1, 1], [], []>} : vector<2x51xf32>, vector<51x16xf32>, vector<2x16xf32> -> vector<2x16xf32>
    %c0_20 = arith.constant 0 : index
    %c0_21 = arith.constant 0 : index
    %31 = vector.load %arg5[%c0_20, %c0_21] : memref<2x16xf32, #tpu.memory_space<vmem>>, vector<2x16xf32>
    tpu.vector_store %arg5[%c0_20, %c0_21], %30 {strides = array<i32>} : memref<2x16xf32, #tpu.memory_space<vmem>>, vector<2x16xf32>,
    %c0_22 = arith.constant 0 : index
    %c0_23 = arith.constant 0 : index
    %32 = vector.load %arg4[%c0_22, %c0_23] : memref<31x16xf32, #tpu.memory_space<vmem>>, vector<31x16xf32>
    %cst_24 = arith.constant dense<0.000000e+00> : vector<2x16xf32>
    %33 = tpu.matmul %28, %32, %cst_24 {dimension_numbers = #tpu.dot_dimension_numbers<[1], [0], [0], [1], [0, 0, 1, 1], [], []>} : vector<2x31xf32>, vector<31x16xf32>, vector<2x16xf32> -> vector<2x16xf32>
    %c0_25 = arith.constant 0 : index
    %c0_26 = arith.constant 0 : index
    %34 = vector.load %arg6[%c0_25, %c0_26] : memref<2x16xf32, #tpu.memory_space<vmem>>, vector<2x16xf32>
    tpu.vector_store %arg6[%c0_25, %c0_26], %33 {strides = array<i32>} : memref<2x16xf32, #tpu.memory_space<vmem>>, vector<2x16xf32>,
    return
  }
}

</mosaic_0001>

<llo_original>
// kernel: tpu_custom_call.1
$region0: #{tpu_custom_call.1}
  #allocation0 [shape = 'u32[]', space=smem, size = 0x4, offset = 0x4, fixed_abs, tag = 'smem constant byte address 0x4 - core index']
  #allocation1 [shape = 'u32[72,128]{1,0:T(1,128)}', space=vmem, size = 0x9000, scoped, tag = 'internal scratch']
  %s0 = inlined_call_operand.vmem [shape: f32[2,31,51], index: 0, kind: input, shape index: {}]
  %s1 = inlined_call_operand.vmem [shape: f32[51,102], index: 1, kind: input, shape index: {}]
  %s2 = inlined_call_operand.vmem [shape: f32[31,62], index: 2, kind: input, shape index: {}]
  %s3 = inlined_call_operand.vmem [shape: f32[51,16], index: 3, kind: input, shape index: {}]
  %s4 = inlined_call_operand.vmem [shape: f32[31,16], index: 4, kind: input, shape index: {}]
  %s5 = inlined_call_operand.hbm [shape: f32[2,16], index: 5, kind: output, shape index: {0}]
  %s6 = inlined_call_operand.hbm [shape: f32[2,16], index: 6, kind: output, shape index: {1}]
  %7 = xla_tuple %s5, %s6
  %s8 = sld [smem:[#allocation0]]
  $region38: #{tpu_custom_call.1} parent=0
    _
  %s10 = ssub.s32 1, %s8
  %s11 = scalar_select 0, %s10, %s8
  $region1: #{tpu_custom_call.1} parent=0
    #allocation2 [shape = 'u8[1024]{0}', space=vmem, size = 0x400, scoped, tag = 'output window, operand 0, single buffered']
    #allocation3 [shape = 's32[1]{0}', space=sflag, size = 0x4, scoped, tag = 'scoped memory for tpu_custom_call.1']
    #allocation4 [shape = 'u8[1024]{0}', space=vmem, size = 0x400, scoped, tag = 'output window, operand 1, single buffered']
    #allocation5 [shape = 's32[1]{0}', space=sflag, size = 0x4, scoped, tag = 'scoped memory for tpu_custom_call.1']
    %12 = vsyncpa [#allocation3], 0
    %13 = vsyncpa [#allocation5], 0
    // Predicated region
    $region2: #{tpu_custom_call.1} parent=1 // pred_check
      _
    $region3: #{tpu_custom_call.1} parent=1 // pred_check_branch
      %15 = sbr.rel (0) target = $region5
    $region4: #{tpu_custom_call.1} parent=1 // pred_region
      _
    $region5: #{tpu_custom_call.1} parent=1 // pred_fallthru
      _
    // Predicated region
    $region6: #{tpu_custom_call.1} parent=1 // pred_check
      _
    $region7: #{tpu_custom_call.1} parent=1 // pred_check_branch
      %17 = sbr.rel (0) target = $region9
    $region8: #{tpu_custom_call.1} parent=1 // pred_region
      _
    $region9: #{tpu_custom_call.1} parent=1 // pred_fallthru
      _
    // Predicated region
    $region10: #{tpu_custom_call.1} parent=1 // pred_check
      _
    $region11: #{tpu_custom_call.1} parent=1 // pred_check_branch
      %19 = sbr.rel (0) target = $region13
    $region12: #{tpu_custom_call.1} parent=1 // pred_region
      _
    $region13: #{tpu_custom_call.1} parent=1 // pred_fallthru
      _
    // Predicated region
    $region14: #{tpu_custom_call.1} parent=1 // pred_check
      _
    $region15: #{tpu_custom_call.1} parent=1 // pred_check_branch
      %21 = sbr.rel (0) target = $region17
    $region16: #{tpu_custom_call.1} parent=1 // pred_region
      _
    $region17: #{tpu_custom_call.1} parent=1 // pred_fallthru
      _
    // Predicated region
    $region18: #{tpu_custom_call.1} parent=1 // pred_check
      _
    $region19: #{tpu_custom_call.1} parent=1 // pred_check_branch
      %23 = sbr.rel (0) target = $region21
    $region20: #{tpu_custom_call.1} parent=1 // pred_region
      _
    $region21: #{tpu_custom_call.1} parent=1 // pred_fallthru
      _
    %v24 = vld [vmem:[%s0] sm:$0xff]
    %v25 = vld [vmem:[%s0 + $0x8] sm:$0xff]
    %v26 = vld [vmem:[%s0 + $0x10] sm:$0xff]
    %v27 = vld [vmem:[%s0 + $0x18] sm:$0x7f]
    %v28 = vld [vmem:[%s0 + $0x20] sm:$0xff]
    %v29 = vld [vmem:[%s0 + $0x28] sm:$0xff]
    %v30 = vld [vmem:[%s0 + $0x30] sm:$0xff]
    %v31 = vld [vmem:[%s0 + $0x38] sm:$0x7f]
    %vm32 = vcmask 416768
    %v33 = vsel %vm32, %v24, 0.0
    %v34 = vsel %vm32, %v25, 0.0
    %v35 = vadd.f32 %v33, %v34
    %v36 = vsel %vm32, %v26, 0.0
    %v37 = vadd.f32 %v35, %v36
    %vm38 = vcmask 415744
    %v39 = vsel %vm38, %v27, 0.0
    %v40 = vadd.f32 %v37, %v39
    %v41 = vrot.slane %v40, 4
    %v42 = vadd.f32 %v40, %v41
    %v43 = vrot.slane %v42, 2
    %v44 = vadd.f32 %v42, %v43
    %v45 = vrot.slane %v44, 1
    %v46 = vadd.f32 %v44, %v45
    %v47 = vsel %vm32, %v28, 0.0
    %v48 = vsel %vm32, %v29, 0.0
    %v49 = vadd.f32 %v47, %v48
    %v50 = vsel %vm32, %v30, 0.0
    %v51 = vadd.f32 %v49, %v50
    %v52 = vsel %vm38, %v31, 0.0
    %v53 = vadd.f32 %v51, %v52
    %v54 = vrot.slane %v53, 4
    %v55 = vadd.f32 %v53, %v54
    %v56 = vrot.slane %v55, 2
    %v57 = vadd.f32 %v55, %v56
    %v58 = vrot.slane %v57, 1
    %v59 = vadd.f32 %v57, %v58
    %60 = vadd.xlane.f32.xlu0 %v33
    %v61 = vpop.xlane.xlu0 %60
    %62 = vadd.xlane.f32.xlu0 %v34
    %v63 = vpop.xlane.xlu0 %62
    %64 = vadd.xlane.f32.xlu0 %v36
    %v65 = vpop.xlane.xlu0 %64
    %66 = vadd.xlane.f32.xlu0 %v39
    %v67 = vpop.xlane.xlu0 %66
    %68 = vadd.xlane.f32.xlu0 %v47
    %v69 = vpop.xlane.xlu0 %68
    %70 = vadd.xlane.f32.xlu0 %v48
    %v71 = vpop.xlane.xlu0 %70
    %72 = vadd.xlane.f32.xlu0 %v50
    %v73 = vpop.xlane.xlu0 %72
    %74 = vadd.xlane.f32.xlu0 %v52
    %v75 = vpop.xlane.xlu0 %74
    %v76 = vld [vmem:[%s1] sm:$0xff]
    %v77 = vld [vmem:[%s1 + $0x8] sm:$0xff]
    %v78 = vld [vmem:[%s1 + $0x10] sm:$0xff]
    %v79 = vld [vmem:[%s1 + $0x18] sm:$0xff]
    %v80 = vld [vmem:[%s1 + $0x20] sm:$0xff]
    %v81 = vld [vmem:[%s1 + $0x28] sm:$0xff]
    %v82 = vld [vmem:[%s1 + $0x30] sm:$0x7]
    %vm85 = vcmask 1041409
    %v86 = vsel %vm85, %v59, %v46
    %v87 = vsel %vm32, %v86, 0
    %vm89 = vcmask 1042432
    %v91 = vsel %vm89, %v82, 0
    %93 = vmatpush.msra.mxu0 0.0
    %94 = vmatpush.msra.mxu0 0.0
    %95 = vmatpush.msra.mxu0 0.0
    %96 = vmatpush.msra.mxu0 0.0
    %97 = vmatpush.msra.mxu0 0.0
    %98 = vmatpush.msra.mxu0 0.0
    %99 = vmatpush.msra.mxu0 0.0
    %100 = vmatpush.msra.mxu0 0.0
    %101 = vmatpush.msra.mxu0 0.0
    %102 = vmatpush.msra.mxu0 %v91
    %103 = vmatpush.msra.mxu0 %v81
    %104 = vmatpush.msra.mxu0 %v80
    %105 = vmatpush.msra.mxu0 %v79
    %106 = vmatpush.msra.mxu0 %v78
    %107 = vmatpush.msra.mxu0 %v77
    %108 = vmatpush.msra.mxu0 %v76
    %109 = vmatmul.f32.gmra.mxu0 %v87
    %v110 = vpop.f32.mrf.mxu0
    %v111 = vadd.f32 0.0, %v110
    %112 = vdwg.mxu0
    %v113 = vmax.f32 %v111, 1e-12
    %115 = vrot.lane.b32.xlu0 %v113, 51
    %v116 = vpop.permute.xlu0 %115
    %v118 = vrcp.pop %v116
    %v119 = vmul.f32 %v116, %v118
    %v120 = vsub.f32 1.0, %v119
    %v121 = vmul.f32 %v118, %v120
    %v122 = vadd.f32 %v118, %v121
    %vm123 = vweird.f32 %v116
    %vm124 = vweird.f32 %v118
    %vm125 = vmor %vm123, %vm124
    %v126 = vsel %vm125, %v118, %v122
    %v127 = vand.u32 2147483647, %v116
    %vm128 = vcmp.eq.f32.partialorder %v127, 8.507059e+37
    %v129 = vand.u32 %v116, 2147483648
    %v130 = vor.u32 1.1754944e-38, %v129
    %v131 = vsel %vm128, %v130, %v126
    %v132 = vmul.f32 %v111, %v131
    %v133 = vsub.f32 %v132, 1.0
    %v134 = vmax.f32 %v133, -1.0
    %v135 = vmin.f32 %v134, 1.0
    %v136 = vld [vmem:[%s2] sm:$0xff]
    %v137 = vld [vmem:[%s2 + $0x8] sm:$0xff]
    %v138 = vld [vmem:[%s2 + $0x10] sm:$0xff]
    %v139 = vld [vmem:[%s2 + $0x18] sm:$0x7f]
    %v148 = vlaneseq
    %v149 = vand.u32 %v148, 127
    %v150 = vperm.slane %v61, %v149
    %v151 = vadd.s32 %v149, 4294967288
    %v152 = vperm.slane %v63, %v151
    %vm153 = vcmask 130112
    %v154 = vsel %vm153, %v152, %v150
    %v155 = vadd.s32 %v149, 4294967280
    %v156 = vperm.slane %v65, %v155
    %vm157 = vcmask 195712
    %v158 = vsel %vm157, %v156, %v154
    %v159 = vadd.s32 %v149, 4294967272
    %v160 = vperm.slane %v67, %v159
    %vm161 = vcmask 261312
    %v162 = vsel %vm161, %v160, %v158
    %v163 = vperm.slane %v69, %v149
    %v164 = vperm.slane %v71, %v151
    %v165 = vsel %vm153, %v164, %v163
    %v166 = vperm.slane %v73, %v155
    %v167 = vsel %vm157, %v166, %v165
    %v168 = vperm.slane %v75, %v159
    %v169 = vsel %vm161, %v168, %v167
    %v170 = vsel %vm85, %v169, %v162
    %vm171 = vcmask 252928
    %v172 = vsel %vm171, %v170, 0
    %vm174 = vcmask 1046528
    %v176 = vsel %vm174, %v139, 0
    %178 = vmatpush.msra.mxu0 0.0
    %179 = vmatpush.msra.mxu0 0.0
    %180 = vmatpush.msra.mxu0 0.0
    %181 = vmatpush.msra.mxu0 0.0
    %182 = vmatpush.msra.mxu0 0.0
    %183 = vmatpush.msra.mxu0 0.0
    %184 = vmatpush.msra.mxu0 0.0
    %185 = vmatpush.msra.mxu0 0.0
    %186 = vmatpush.msra.mxu0 0.0
    %187 = vmatpush.msra.mxu0 0.0
    %188 = vmatpush.msra.mxu0 0.0
    %189 = vmatpush.msra.mxu0 0.0
    %190 = vmatpush.msra.mxu0 %v176
    %191 = vmatpush.msra.mxu0 %v138
    %192 = vmatpush.msra.mxu0 %v137
    %193 = vmatpush.msra.mxu0 %v136
    %194 = vmatmul.f32.gmra.mxu0 %v172
    %v195 = vpop.f32.mrf.mxu0
    %v196 = vadd.f32 0.0, %v195
    %197 = vdwg.mxu0
    %v198 = vmax.f32 %v196, 1e-12
    %200 = vrot.lane.b32.xlu0 %v198, 31
    %v201 = vpop.permute.xlu0 %200
    %v203 = vrcp.pop %v201
    %v204 = vmul.f32 %v201, %v203
    %v205 = vsub.f32 1.0, %v204
    %v206 = vmul.f32 %v203, %v205
    %v207 = vadd.f32 %v203, %v206
    %vm208 = vweird.f32 %v201
    %vm209 = vweird.f32 %v203
    %vm210 = vmor %vm208, %vm209
    %v211 = vsel %vm210, %v203, %v207
    %v212 = vand.u32 2147483647, %v201
    %vm213 = vcmp.eq.f32.partialorder %v212, 8.507059e+37
    %v214 = vand.u32 %v201, 2147483648
    %v215 = vor.u32 1.1754944e-38, %v214
    %v216 = vsel %vm213, %v215, %v211
    %v217 = vmul.f32 %v196, %v216
    %v218 = vsub.f32 %v217, 1.0
    %v219 = vmax.f32 %v218, -1.0
    %v220 = vmin.f32 %v219, 1.0
    %v221 = vld [vmem:[%s3] sm:$0xff]
    %v222 = vld [vmem:[%s3 + $0x8] sm:$0xff]
    %v223 = vld [vmem:[%s3 + $0x10] sm:$0xff]
    %v224 = vld [vmem:[%s3 + $0x18] sm:$0xff]
    %v225 = vld [vmem:[%s3 + $0x20] sm:$0xff]
    %v226 = vld [vmem:[%s3 + $0x28] sm:$0xff]
    %v227 = vld [vmem:[%s3 + $0x30] sm:$0x7]
    %229 = vrot.lane.b32.xlu0 %v135, 77
    %v230 = vpop.permute.xlu0 %229
    %v231 = vsel %vm32, %v230, 0
    %v234 = vsel %vm89, %v227, 0
    %236 = vmatpush.msra.mxu0 0.0
    %237 = vmatpush.msra.mxu0 0.0
    %238 = vmatpush.msra.mxu0 0.0
    %239 = vmatpush.msra.mxu0 0.0
    %240 = vmatpush.msra.mxu0 0.0
    %241 = vmatpush.msra.mxu0 0.0
    %242 = vmatpush.msra.mxu0 0.0
    %243 = vmatpush.msra.mxu0 0.0
    %244 = vmatpush.msra.mxu0 0.0
    %245 = vmatpush.msra.mxu0 %v234
    %246 = vmatpush.msra.mxu0 %v226
    %247 = vmatpush.msra.mxu0 %v225
    %248 = vmatpush.msra.mxu0 %v224
    %249 = vmatpush.msra.mxu0 %v223
    %250 = vmatpush.msra.mxu0 %v222
    %251 = vmatpush.msra.mxu0 %v221
    %252 = vmatmul.f32.gmra.mxu0 %v231
    %v253 = vpop.f32.mrf.mxu0
    %v254 = vadd.f32 0.0, %v253
    %255 = vdwg.mxu0
    %vm256 = vcmask 123904
    %257 = vst.msk [vmem:[#allocation2] sm:$0x3] %vm256, %v254
    %v258 = vld [vmem:[%s4] sm:$0xff]
    %v259 = vld [vmem:[%s4 + $0x8] sm:$0xff]
    %v260 = vld [vmem:[%s4 + $0x10] sm:$0xff]
    %v261 = vld [vmem:[%s4 + $0x18] sm:$0x7f]
    %263 = vrot.lane.b32.xlu0 %v220, 97
    %v264 = vpop.permute.xlu0 %263
    %v265 = vsel %vm171, %v264, 0
    %v268 = vsel %vm174, %v261, 0
    %270 = vmatpush.msra.mxu0 0.0
    %271 = vmatpush.msra.mxu0 0.0
    %272 = vmatpush.msra.mxu0 0.0
    %273 = vmatpush.msra.mxu0 0.0
    %274 = vmatpush.msra.mxu0 0.0
    %275 = vmatpush.msra.mxu0 0.0
    %276 = vmatpush.msra.mxu0 0.0
    %277 = vmatpush.msra.mxu0 0.0
    %278 = vmatpush.msra.mxu0 0.0
    %279 = vmatpush.msra.mxu0 0.0
    %280 = vmatpush.msra.mxu0 0.0
    %281 = vmatpush.msra.mxu0 0.0
    %282 = vmatpush.msra.mxu0 %v268
    %283 = vmatpush.msra.mxu0 %v260
    %284 = vmatpush.msra.mxu0 %v259
    %285 = vmatpush.msra.mxu0 %v258
    %286 = vmatmul.f32.gmra.mxu0 %v265
    %v287 = vpop.f32.mrf.mxu0
    %v288 = vadd.f32 0.0, %v287
    %289 = vdwg.mxu0
    %290 = vst.msk [vmem:[#allocation4] sm:$0x3] %vm256, %v288
    // Predicated region
    $region22: #{tpu_custom_call.1} parent=1 // pred_check
      _
    $region23: #{tpu_custom_call.1} parent=1 // pred_check_branch
      %292 = sbr.rel (0) target = $region25
    $region24: #{tpu_custom_call.1} parent=1 // pred_region
      %294 = vsyncadd [#allocation3], 0
      %s296 = sshll.u32 [#allocation2], 4
      %s297 = int_to_ptr.vmem [resolvable:$true] %s296
      %s298 = sshll.u32 %s5, 4
      %s299 = int_to_ptr.hbm [resolvable:$true] %s298
      %301 = dma.vmem_to_hbm [thread:$0]  %s297, 32, %s299, [#allocation3]
    $region25: #{tpu_custom_call.1} parent=1 // pred_fallthru
      _
    // Predicated region
    $region26: #{tpu_custom_call.1} parent=1 // pred_check
      _
    $region27: #{tpu_custom_call.1} parent=1 // pred_check_branch
      %303 = sbr.rel (0) target = $region29
    $region28: #{tpu_custom_call.1} parent=1 // pred_region
      %305 = vsyncadd [#allocation5], 0
      %s307 = sshll.u32 [#allocation4], 4
      %s308 = int_to_ptr.vmem [resolvable:$true] %s307
      %s309 = sshll.u32 %s6, 4
      %s310 = int_to_ptr.hbm [resolvable:$true] %s309
      %312 = dma.vmem_to_hbm [thread:$0]  %s308, 32, %s310, [#allocation5]
    $region29: #{tpu_custom_call.1} parent=1 // pred_fallthru
      _
    // Predicated region
    $region30: #{tpu_custom_call.1} parent=1 // pred_check
      _
    $region31: #{tpu_custom_call.1} parent=1 // pred_check_branch
      %314 = sbr.rel (0) target = $region33
    $region32: #{tpu_custom_call.1} parent=1 // pred_region
      %316 = dma.done [#allocation3], 32
    $region33: #{tpu_custom_call.1} parent=1 // pred_fallthru
      _
    // Predicated region
    $region34: #{tpu_custom_call.1} parent=1 // pred_check
      _
    $region35: #{tpu_custom_call.1} parent=1 // pred_check_branch
      %318 = sbr.rel (0) target = $region37
    $region36: #{tpu_custom_call.1} parent=1 // pred_region
      %320 = dma.done [#allocation5], 32
    $region37: #{tpu_custom_call.1} parent=1 // pred_fallthru
      _
    %321 = vsyncpa [#allocation3], 1
    %322 = vsyncpa [#allocation5], 1

</llo_original>
